<compile_context>
chip_gen: v6e
topology: v6e:2x2x1
jax: 0.10.0
libtpu: 0.0.40
codegen_flags: <defaults>
</compile_context>

<pallas_src>
import functools

import jax
import jax.numpy as jnp
from jax import lax
from jax.experimental import pallas as pl
from jax.experimental.pallas import tpu as pltpu


def _round_up(x, m):
    return ((x + m - 1) // m) * m


def _polarized_gemm_kernel(x_ref, w_ref, o_ref, *scratch, num_protos, apply_clamp):
    """One (tm, tn) output tile, accumulated over the tk (prototype) grid axis.

    x_ref: (tm, tk)  batch x prototypes
    w_ref: (tk, tn)  prototypes x classes   (weight pre-transposed in the wrapper)
    """
    acc_ref = scratch[0] if scratch else o_ref  # f32 out -> accumulate in place
    k = pl.program_id(2)

    @pl.when(k == 0)
    def _init():
        acc_ref[...] = jnp.zeros_like(acc_ref)

    w = w_ref[...]
    if apply_clamp:
        bk, bn = w.shape  # static block shape
        # sign_matrix > 0  <=>  global prototype row lies in the class's window
        #   [c*num_protos, c*num_protos + num_protos).  Fold the grid offsets into the
        # window bound so we only need two iotas, one mul/sub, two cmps and an and.
        row = lax.broadcasted_iota(jnp.int32, (bk, 1), 0)            # local prototype idx
        col = lax.broadcasted_iota(jnp.int32, (1, bn), 1)            # local class idx
        lo = (col + pl.program_id(1) * bn) * num_protos - k * bk     # window start (local rows)
        pos = (row >= lo) & (row < lo + num_protos)                  # (bk, bn) sign>0 mask
        # keep w where its sign agrees with the sign matrix, else 0 (== max/min clamp)
        keep = (w > 0) == pos
        w = jnp.where(keep, w, jnp.zeros((), w.dtype))

    acc_ref[...] += jnp.dot(x_ref[...], w, preferred_element_type=jnp.float32)

    if scratch:
        @pl.when(k == pl.num_programs(2) - 1)
        def _store():
            o_ref[...] = acc_ref[...].astype(o_ref.dtype)


def polarized_classification_forward(
    x,
    weight,
    num_protos,
    *,
    compute_dtype=jnp.bfloat16,
    tm=512,
    tn=512,
    tk=1024,
    out_dtype=None,
):
    """out[b, c] = sum_p x[b, p] * clamp_by_sign(weight[c, p])   (no bias)."""
    B, P = x.shape
    C, P2 = weight.shape
    assert P == P2, "weight second dim must equal total_prototypes"
    assert P == C * num_protos, "total_prototypes must equal num_classes * num_protos"

    compute_dtype = jnp.dtype(compute_dtype)
    out_dtype = jnp.dtype(out_dtype) if out_dtype is not None else jnp.dtype(x.dtype)
    use_scratch = out_dtype != jnp.dtype(jnp.float32)

    # Sublane multiple for the streamed dtype: f32 -> 8, bf16 -> 16, int8/fp8 -> 32.
    sub = max(8, 32 // compute_dtype.itemsize)

    # Clamp tile sizes to the (aligned) problem; keep (sub, 128) alignment.
    tm = max(sub, min(tm, _round_up(B, sub)))
    tn = max(128, min(tn, _round_up(C, 128)))
    tk = max(128, min(tk, _round_up(P, 128)))

    B_pad = _round_up(B, tm)
    C_pad = _round_up(C, tn)   # lane-dense output (multiple of 128)
    P_pad = _round_up(P, tk)

    # v7x has two TensorCores: make sure at least one "parallel" axis has >= 2 tiles
    # when the problem allows it, otherwise one core idles.
    if B_pad // tm == 1 and C_pad // tn == 1:
        if tn >= 256 and tn % 256 == 0:
            tn //= 2                               # C_pad stays divisible by tn
        elif tm >= 2 * sub:
            tm = _round_up(tm // 2, sub)
            B_pad = _round_up(B, tm)

    n_batch_tiles = B_pad // tm

    # The clamp is (class, prototype)-only work. If the batch spans many tiles, hoist it
    # to a single wrapper pass so it is not recomputed once per batch tile.
    w = weight
    preclamp = n_batch_tiles > 2
    if preclamp:
        pos = (jnp.arange(P, dtype=jnp.int32) // num_protos)[None, :] == \
              jnp.arange(C, dtype=jnp.int32)[:, None]
        w = jnp.where((w > 0) == pos, w, 0).astype(w.dtype)

    # Stream operands in compute_dtype; pre-transpose the weight to (P, C) so the kernel
    # runs a standard (M,K)x(K,N) MXU matmul with no in-kernel relayout.
    x_c = x.astype(compute_dtype)
    w_t = w.T.astype(compute_dtype)  # (P, C)

    if (B_pad, P_pad) != (B, P):
        x_c = jnp.pad(x_c, ((0, B_pad - B), (0, P_pad - P)))
    if (P_pad, C_pad) != (P, C):
        w_t = jnp.pad(w_t, ((0, P_pad - P), (0, C_pad - C)))

    grid = (B_pad // tm, C_pad // tn, P_pad // tk)

    kernel = functools.partial(
        _polarized_gemm_kernel, num_protos=num_protos, apply_clamp=not preclamp
    )
    scratch_shapes = [pltpu.VMEM((tm, tn), jnp.float32)] if use_scratch else []

    # VMEM budget: double-buffered x/w/out tiles (+ f32 acc if any), capped at 48 MiB so
    # it is valid on v7x (64 MiB physical) as well as v5e/v6e (128 MiB).
    cd = compute_dtype.itemsize
    vmem_need = (
        2 * (tm * tk + tk * tn) * cd
        + 2 * tm * tn * out_dtype.itemsize
        + (tm * tn * 4 if use_scratch else 0)
    )
    vmem_limit = int(min(48 * 1024 * 1024, max(32 * 1024 * 1024, 2 * vmem_need)))

    cost = pl.CostEstimate(
        flops=2 * B * C * P,
        bytes_accessed=int(
            x_c.size * cd + w_t.size * cd * n_batch_tiles + B_pad * C_pad * out_dtype.itemsize
        ),
        transcendentals=0,
    )

    out_padded = pl.pallas_call(
        kernel,
        out_shape=jax.ShapeDtypeStruct((B_pad, C_pad), out_dtype),
        grid_spec=pltpu.PrefetchScalarGridSpec(
            num_scalar_prefetch=0,
            grid=grid,
            in_specs=[
                pl.BlockSpec((tm, tk), lambda i, j, k: (i, k)),  # x tile
                pl.BlockSpec((tk, tn), lambda i, j, k: (k, j)),  # weight.T tile
            ],
            out_specs=pl.BlockSpec((tm, tn), lambda i, j, k: (i, j)),
            scratch_shapes=scratch_shapes,
        ),
        compiler_params=pltpu.CompilerParams(
            dimension_semantics=("parallel", "parallel", "arbitrary"),
            vmem_limit_bytes=vmem_limit,
        ),
        cost_estimate=cost,
    )(x_c, w_t)

    return out_padded[:B, :C]


# TODO(synk): the PyTorch module mutates self.weight.data in-place under no_grad; here the
# clamp is applied functionally on the fly (same forward output, no parameter side effect).


if __name__ == "__main__":
    key = jax.random.PRNGKey(0)
    k_x, k_w, k_x2 = jax.random.split(key, 3)

    def make_weight(num_classes, num_protos, key):
        total = num_classes * num_protos
        sign = jnp.where(
            (jnp.arange(total) // num_protos)[None, :] == jnp.arange(num_classes)[:, None],
            1.0, -1.0,
        ).astype(jnp.float32)
        # Perturb so the polarized clamp is actually exercised.
        return sign + 0.1 * jax.random.normal(key, (num_classes, total), jnp.float32)

    def reference(x, weight, num_protos, compute_dtype, out_dtype):
        C, P = weight.shape
        pos = (jnp.arange(P) // num_protos)[None, :] == jnp.arange(C)[:, None]
        w_cl = jnp.where(pos, jnp.maximum(weight, 0.0), jnp.minimum(weight, 0.0))
        xc = x.astype(compute_dtype).astype(jnp.float32)
        wc = w_cl.astype(compute_dtype).astype(jnp.float32)
        return (xc @ wc.T).astype(out_dtype)

    # --- Test 1: exact f32 path (bit-matches the module's forward math) ---
    num_classes, num_protos = 4, 8
    batch = 8
    x = jax.random.normal(k_x, (batch, num_classes * num_protos), jnp.float32)
    w = make_weight(num_classes, num_protos, k_w)

    out_f32 = jax.block_until_ready(
        polarized_classification_forward(x, w, num_protos, compute_dtype=jnp.float32)
    )
    ref_f32 = reference(x, w, num_protos, jnp.float32, jnp.float32)
    assert out_f32.shape == (batch, num_classes)
    assert jnp.allclose(out_f32, ref_f32, atol=1e-5, rtol=1e-5), (
        f"f32 max err {jnp.max(jnp.abs(out_f32 - ref_f32))}"
    )

    # --- Test 2: default bf16-streaming path (f32 accumulation) ---
    out_bf = jax.block_until_ready(polarized_classification_forward(x, w, num_protos))
    ref_bf = reference(x, w, num_protos, jnp.bfloat16, jnp.float32)
    assert jnp.allclose(out_bf, ref_bf, atol=1e-2, rtol=1e-2), (
        f"bf16 max err {jnp.max(jnp.abs(out_bf - ref_bf))}"
    )

    # --- Test 3: multi-tile batch + reduction grid, wrapper pre-clamp, bf16 in/out ---
    num_classes3, num_protos3 = 4, 64      # P = 256 -> two tk=128 reduction steps
    batch3 = 64                             # 4 batch tiles of tm=16 -> pre-clamp path
    x3 = jax.random.normal(k_x2, (batch3, num_classes3 * num_protos3), jnp.float32)
    w3 = make_weight(num_classes3, num_protos3, k_w)
    out3 = jax.block_until_ready(
        polarized_classification_forward(
            x3.astype(jnp.bfloat16), w3, num_protos3, tm=16, tk=128
        )
    )
    ref3 = reference(x3.astype(jnp.bfloat16), w3, num_protos3, jnp.bfloat16, jnp.bfloat16)
    assert out3.shape == (batch3, num_classes3)
    assert jnp.allclose(
        out3.astype(jnp.float32), ref3.astype(jnp.float32), atol=0.1, rtol=0.05
    ), f"bf16 multi-tile max err {jnp.max(jnp.abs(out3.astype(jnp.float32) - ref3.astype(jnp.float32)))}"

    print("KERNEL_OK")
</pallas_src>

<mosaic_0001>
module attributes {stable_mosaic.version = 11 : i64} {
  func.func @_polarized_gemm_kernel(%arg0: i32, %arg1: i32, %arg2: i32, %arg3: memref<8x128xf32, #tpu.memory_space<vmem>>, %arg4: memref<128x128xf32, #tpu.memory_space<vmem>>, %arg5: memref<8x128xf32, #tpu.memory_space<vmem>>) attributes {dimension_semantics = [#tpu.dimension_semantics<parallel>, #tpu.dimension_semantics<parallel>, #tpu.dimension_semantics<arbitrary>], iteration_bounds = array<i64: 1, 1, 1>, scalar_prefetch = 0 : i64, scratch_operands = 0 : i64, tpu.core_type = #tpu.core_type<tc>, window_params = [{transform_indices = @transform_0, window_bounds = array<i64: 8, 128>}, {transform_indices = @transform_1, window_bounds = array<i64: 128, 128>}, {transform_indices = @transform_2, window_bounds = array<i64: 8, 128>}]} {
    %c0_i32 = arith.constant 0 : i32
    %0 = arith.cmpi eq, %arg2, %c0_i32 : i32
    %1 = arith.extui %0 : i1 to i32
    %c0_i32_0 = arith.constant 0 : i32
    %2 = arith.cmpi ne, %1, %c0_i32_0 : i32
    scf.if %2 {
      %cst_13 = arith.constant 0.000000e+00 : f32
      %34 = vector.broadcast %cst_13 : f32 to vector<8x128xf32>
      %c0_14 = arith.constant 0 : index
      %c0_15 = arith.constant 0 : index
      %35 = vector.load %arg5[%c0_14, %c0_15] : memref<8x128xf32, #tpu.memory_space<vmem>>, vector<8x128xf32>
      tpu.vector_store %arg5[%c0_14, %c0_15], %34 {strides = array<i32>} : memref<8x128xf32, #tpu.memory_space<vmem>>, vector<8x128xf32>,
    } else {
    }
    %c0 = arith.constant 0 : index
    %c0_1 = arith.constant 0 : index
    %3 = vector.load %arg4[%c0, %c0_1] : memref<128x128xf32, #tpu.memory_space<vmem>>, vector<128x128xf32>
    %4 = tpu.iota {dimensions = array<i32: 0>} : vector<128x1xi32>
    %5 = tpu.iota {dimensions = array<i32: 1>} : vector<1x128xi32>
    %c128_i32 = arith.constant 128 : i32
    %6 = arith.muli %arg1, %c128_i32 : i32
    %7 = vector.broadcast %6 : i32 to vector<1x128xi32>
    %8 = arith.addi %5, %7 : vector<1x128xi32>
    %c8_i32 = arith.constant 8 : i32
    %9 = vector.broadcast %c8_i32 : i32 to vector<1x128xi32>
    %10 = arith.muli %8, %9 : vector<1x128xi32>
    %c128_i32_2 = arith.constant 128 : i32
    %11 = arith.muli %arg2, %c128_i32_2 : i32
    %12 = vector.broadcast %11 : i32 to vector<1x128xi32>
    %13 = arith.subi %10, %12 : vector<1x128xi32>
    %14 = vector.broadcast %4 : vector<128x1xi32> to vector<128x128xi32>
    %15 = vector.broadcast %13 : vector<1x128xi32> to vector<128x128xi32>
    %16 = arith.cmpi sge, %14, %15 : vector<128x128xi32>
    %c8_i32_3 = arith.constant 8 : i32
    %17 = vector.broadcast %c8_i32_3 : i32 to vector<1x128xi32>
    %18 = arith.addi %13, %17 : vector<1x128xi32>
    %19 = vector.broadcast %4 : vector<128x1xi32> to vector<128x128xi32>
    %20 = vector.broadcast %18 : vector<1x128xi32> to vector<128x128xi32>
    %21 = arith.cmpi slt, %19, %20 : vector<128x128xi32>
    %22 = arith.andi %16, %21 : vector<128x128xi1>
    %cst = arith.constant 0.000000e+00 : f32
    %23 = vector.broadcast %cst : f32 to vector<128x128xf32>
    %24 = arith.cmpf ogt, %3, %23 : vector<128x128xf32>
    %25 = arith.xori %24, %22 : vector<128x128xi1>
    %cst_4 = arith.constant dense<true> : vector<128x128xi1>
    %26 = arith.xori %25, %cst_4 : vector<128x128xi1>
    %cst_5 = arith.constant 0.000000e+00 : f32
    %27 = vector.broadcast %cst_5 : f32 to vector<128x128xf32>
    %28 = arith.select %26, %3, %27 : vector<128x128xi1>, vector<128x128xf32>
    %c0_6 = arith.constant 0 : index
    %c0_7 = arith.constant 0 : index
    %29 = vector.load %arg5[%c0_6, %c0_7] : memref<8x128xf32, #tpu.memory_space<vmem>>, vector<8x128xf32>
    %c0_8 = arith.constant 0 : index
    %c0_9 = arith.constant 0 : index
    %30 = vector.load %arg3[%c0_8, %c0_9] : memref<8x128xf32, #tpu.memory_space<vmem>>, vector<8x128xf32>
    %cst_10 = arith.constant dense<0.000000e+00> : vector<8x128xf32>
    %31 = tpu.matmul %30, %28, %cst_10 {dimension_numbers = #tpu.dot_dimension_numbers<[1], [0], [0], [1], [0, 0, 1, 1], [], []>} : vector<8x128xf32>, vector<128x128xf32>, vector<8x128xf32> -> vector<8x128xf32>
    %32 = arith.addf %29, %31 : vector<8x128xf32>
    %c0_11 = arith.constant 0 : index
    %c0_12 = arith.constant 0 : index
    %33 = vector.load %arg5[%c0_11, %c0_12] : memref<8x128xf32, #tpu.memory_space<vmem>>, vector<8x128xf32>
    tpu.vector_store %arg5[%c0_11, %c0_12], %32 {strides = array<i32>} : memref<8x128xf32, #tpu.memory_space<vmem>>, vector<8x128xf32>,
    return
  }
  func.func @transform_0(%arg0: i32, %arg1: i32, %arg2: i32) -> (i32, i32) {
    %c0_i32 = arith.constant 0 : i32
    return %arg0, %arg2 : i32, i32
  }
  func.func @transform_1(%arg0: i32, %arg1: i32, %arg2: i32) -> (i32, i32) {
    %c0_i32 = arith.constant 0 : i32
    return %arg2, %arg1 : i32, i32
  }
  func.func @transform_2(%arg0: i32, %arg1: i32, %arg2: i32) -> (i32, i32) {
    %c0_i32 = arith.constant 0 : i32
    return %arg0, %arg1 : i32, i32
  }
}

</mosaic_0001>

<llo_original>
// kernel: tpu_custom_call.1
$region0: #{tpu_custom_call.1}
  #allocation0 [shape = 'u32[]', space=smem, size = 0x4, offset = 0x4, fixed_abs, tag = 'smem constant byte address 0x4 - core index']
  #allocation1 [shape = 'u32[144,128]{1,0:T(1,128)}', space=vmem, size = 0x12000, scoped, tag = 'internal scratch']
  %s0 = inlined_call_operand.hbm [shape: f32[8,128], index: 0, kind: input, shape index: {}]
  %s1 = inlined_call_operand.hbm [shape: f32[128,128], index: 1, kind: input, shape index: {}]
  %s2 = inlined_call_operand.hbm [shape: f32[8,128], index: 2, kind: output, shape index: {}]
  %s3 = sld [smem:[#allocation0]]
  $region30: #{tpu_custom_call.1} parent=0
    _
  %s5 = ssub.s32 1, %s3
  %s6 = scalar_select 0, %s5, %s3
  $region1: #{tpu_custom_call.1} parent=0
    #allocation2 [shape = 'u8[4096]{0}', space=vmem, size = 0x1000, scoped, tag = 'input window, operand 0, single buffered']
    #allocation3 [shape = 's32[1]{0}', space=sflag, size = 0x4, scoped, tag = 'scoped memory for tpu_custom_call.1']
    #allocation4 [shape = 's32[1]{0}', space=sflag, size = 0x4, scoped, tag = 'scoped memory for tpu_custom_call.1']
    #allocation5 [shape = 'u8[65536]{0}', space=vmem, size = 0x10000, scoped, tag = 'input window, operand 1, single buffered']
    #allocation6 [shape = 's32[1]{0}', space=sflag, size = 0x4, scoped, tag = 'scoped memory for tpu_custom_call.1']
    #allocation7 [shape = 'u8[4096]{0}', space=vmem, size = 0x1000, scoped, tag = 'output window, operand 0, single buffered']
    %7 = vsyncpa [#allocation3], 0
    %8 = vsyncpa [#allocation6], 0
    %9 = vsyncpa [#allocation4], 0
    // Predicated region
    $region2: #{tpu_custom_call.1} parent=1 // pred_check
      _
    $region3: #{tpu_custom_call.1} parent=1 // pred_check_branch
      %11 = sbr.rel (0) target = $region5
    $region4: #{tpu_custom_call.1} parent=1 // pred_region
      %s13 = ssub.s32 128, 128
      %14 = vsyncadd [#allocation3], %s13
      %s16 = sshll.u32 [#allocation2], 4
      %s17 = int_to_ptr.vmem [resolvable:$true] %s16
      %19 = dma.hbm_to_vmem [thread:$0]  %s0, 128, %s17, [#allocation3]
    $region5: #{tpu_custom_call.1} parent=1 // pred_fallthru
      _
    // Predicated region
    $region6: #{tpu_custom_call.1} parent=1 // pred_check
      _
    $region7: #{tpu_custom_call.1} parent=1 // pred_check_branch
      %21 = sbr.rel (0) target = $region9
    $region8: #{tpu_custom_call.1} parent=1 // pred_region
      %s23 = ssub.s32 2048, 2048
      %24 = vsyncadd [#allocation6], %s23
      %s25 = sshll.u32 [#allocation5], 4
      %s26 = int_to_ptr.vmem [resolvable:$true] %s25
      %31 = dma.hbm_to_vmem [thread:$0]  %s1, 2048, %s26, [#allocation6], 128, 128, 8
    $region9: #{tpu_custom_call.1} parent=1 // pred_fallthru
      _
    // Predicated region
    $region10: #{tpu_custom_call.1} parent=1 // pred_check
      _
    $region11: #{tpu_custom_call.1} parent=1 // pred_check_branch
      %33 = sbr.rel (0) target = $region13
    $region12: #{tpu_custom_call.1} parent=1 // pred_region
      %34 = dma.done [#allocation3], 128
    $region13: #{tpu_custom_call.1} parent=1 // pred_fallthru
      _
    // Predicated region
    $region14: #{tpu_custom_call.1} parent=1 // pred_check
      _
    $region15: #{tpu_custom_call.1} parent=1 // pred_check_branch
      %36 = sbr.rel (0) target = $region17
    $region16: #{tpu_custom_call.1} parent=1 // pred_region
      %37 = dma.done [#allocation6], 2048
    $region17: #{tpu_custom_call.1} parent=1 // pred_fallthru
      _
    %p38 = scmp.eq.s32.totalorder 0, 0
    // Predicated region
    $region18: #{tpu_custom_call.1} parent=1 // pred_check
      %p39 = pneg %p38
    $region19: #{tpu_custom_call.1} parent=1 // pred_check_branch
      %41 = sbr.rel (%p39) target = $region21
    $region20: #{tpu_custom_call.1} parent=1 // pred_region
      %42 = vst [vmem:[#allocation7] sm:$0xff] 0.0
    $region21: #{tpu_custom_call.1} parent=1 // pred_fallthru
      _
    %v43 = vld [vmem:[#allocation5] sm:$0xff]
    %v44 = vld [vmem:[#allocation5 + $0x8] sm:$0xff]
    %v45 = vld [vmem:[#allocation5 + $0x10] sm:$0xff]
    %v46 = vld [vmem:[#allocation5 + $0x18] sm:$0xff]
    %v47 = vld [vmem:[#allocation5 + $0x20] sm:$0xff]
    %v48 = vld [vmem:[#allocation5 + $0x28] sm:$0xff]
    %v49 = vld [vmem:[#allocation5 + $0x30] sm:$0xff]
    %v50 = vld [vmem:[#allocation5 + $0x38] sm:$0xff]
    %v51 = vld [vmem:[#allocation5 + $0x40] sm:$0xff]
    %v52 = vld [vmem:[#allocation5 + $0x48] sm:$0xff]
    %v53 = vld [vmem:[#allocation5 + $0x50] sm:$0xff]
    %v54 = vld [vmem:[#allocation5 + $0x58] sm:$0xff]
    %v55 = vld [vmem:[#allocation5 + $0x60] sm:$0xff]
    %v56 = vld [vmem:[#allocation5 + $0x68] sm:$0xff]
    %v57 = vld [vmem:[#allocation5 + $0x70] sm:$0xff]
    %v58 = vld [vmem:[#allocation5 + $0x78] sm:$0xff]
    %v59 = vlaneseq
    %v60 = vshrl.u32 %v59, 7
    %v61 = vadd.s32 %v60, 8
    %v62 = vadd.s32 %v60, 16
    %v63 = vadd.s32 %v60, 24
    %v64 = vadd.s32 %v60, 32
    %v65 = vadd.s32 %v60, 40
    %v66 = vadd.s32 %v60, 48
    %v67 = vadd.s32 %v60, 56
    %v68 = vadd.s32 %v60, 64
    %v69 = vadd.s32 %v60, 72
    %v70 = vadd.s32 %v60, 80
    %v71 = vadd.s32 %v60, 88
    %v72 = vadd.s32 %v60, 96
    %v73 = vadd.s32 %v60, 104
    %v74 = vadd.s32 %v60, 112
    %v75 = vadd.s32 %v60, 120
    %v76 = vlaneseq
    %v77 = vand.u32 %v76, 127
    %s78 = smul.u32 0, 128
    %v79 = vstv %s78
    %v80 = vadd.s32 %v77, %v79
    %v81 = vmul.u32 %v80, 8
    %s82 = smul.u32 0, 128
    %v83 = vstv %s82
    %v84 = vsub.s32 %v81, %v83
    %vm85 = vcmp.ge.s32.totalorder %v60, %v84
    %vm86 = vcmp.ge.s32.totalorder %v61, %v84
    %vm87 = vcmp.ge.s32.totalorder %v62, %v84
    %vm88 = vcmp.ge.s32.totalorder %v63, %v84
    %vm89 = vcmp.ge.s32.totalorder %v64, %v84
    %vm90 = vcmp.ge.s32.totalorder %v65, %v84
    %vm91 = vcmp.ge.s32.totalorder %v66, %v84
    %vm92 = vcmp.ge.s32.totalorder %v67, %v84
    %vm93 = vcmp.ge.s32.totalorder %v68, %v84
    %vm94 = vcmp.ge.s32.totalorder %v69, %v84
    %vm95 = vcmp.ge.s32.totalorder %v70, %v84
    %vm96 = vcmp.ge.s32.totalorder %v71, %v84
    %vm97 = vcmp.ge.s32.totalorder %v72, %v84
    %vm98 = vcmp.ge.s32.totalorder %v73, %v84
    %vm99 = vcmp.ge.s32.totalorder %v74, %v84
    %vm100 = vcmp.ge.s32.totalorder %v75, %v84
    %v101 = vadd.s32 %v84, 8
    %vm102 = vcmp.lt.s32.totalorder %v60, %v101
    %vm103 = vcmp.lt.s32.totalorder %v61, %v101
    %vm104 = vcmp.lt.s32.totalorder %v62, %v101
    %vm105 = vcmp.lt.s32.totalorder %v63, %v101
    %vm106 = vcmp.lt.s32.totalorder %v64, %v101
    %vm107 = vcmp.lt.s32.totalorder %v65, %v101
    %vm108 = vcmp.lt.s32.totalorder %v66, %v101
    %vm109 = vcmp.lt.s32.totalorder %v67, %v101
    %vm110 = vcmp.lt.s32.totalorder %v68, %v101
    %vm111 = vcmp.lt.s32.totalorder %v69, %v101
    %vm112 = vcmp.lt.s32.totalorder %v70, %v101
    %vm113 = vcmp.lt.s32.totalorder %v71, %v101
    %vm114 = vcmp.lt.s32.totalorder %v72, %v101
    %vm115 = vcmp.lt.s32.totalorder %v73, %v101
    %vm116 = vcmp.lt.s32.totalorder %v74, %v101
    %vm117 = vcmp.lt.s32.totalorder %v75, %v101
    %vm118 = vmand %vm85, %vm102
    %vm119 = vmand %vm86, %vm103
    %vm120 = vmand %vm87, %vm104
    %vm121 = vmand %vm88, %vm105
    %vm122 = vmand %vm89, %vm106
    %vm123 = vmand %vm90, %vm107
    %vm124 = vmand %vm91, %vm108
    %vm125 = vmand %vm92, %vm109
    %vm126 = vmand %vm93, %vm110
    %vm127 = vmand %vm94, %vm111
    %vm128 = vmand %vm95, %vm112
    %vm129 = vmand %vm96, %vm113
    %vm130 = vmand %vm97, %vm114
    %vm131 = vmand %vm98, %vm115
    %vm132 = vmand %vm99, %vm116
    %vm133 = vmand %vm100, %vm117
    %vm134 = vcmp.gt.f32.partialorder %v43, 0.0
    %vm135 = vcmp.gt.f32.partialorder %v44, 0.0
    %vm136 = vcmp.gt.f32.partialorder %v45, 0.0
    %vm137 = vcmp.gt.f32.partialorder %v46, 0.0
    %vm138 = vcmp.gt.f32.partialorder %v47, 0.0
    %vm139 = vcmp.gt.f32.partialorder %v48, 0.0
    %vm140 = vcmp.gt.f32.partialorder %v49, 0.0
    %vm141 = vcmp.gt.f32.partialorder %v50, 0.0
    %vm142 = vcmp.gt.f32.partialorder %v51, 0.0
    %vm143 = vcmp.gt.f32.partialorder %v52, 0.0
    %vm144 = vcmp.gt.f32.partialorder %v53, 0.0
    %vm145 = vcmp.gt.f32.partialorder %v54, 0.0
    %vm146 = vcmp.gt.f32.partialorder %v55, 0.0
    %vm147 = vcmp.gt.f32.partialorder %v56, 0.0
    %vm148 = vcmp.gt.f32.partialorder %v57, 0.0
    %vm149 = vcmp.gt.f32.partialorder %v58, 0.0
    %vm150 = vmxor %vm134, %vm118
    %vm151 = vmxor %vm135, %vm119
    %vm152 = vmxor %vm136, %vm120
    %vm153 = vmxor %vm137, %vm121
    %vm154 = vmxor %vm138, %vm122
    %vm155 = vmxor %vm139, %vm123
    %vm156 = vmxor %vm140, %vm124
    %vm157 = vmxor %vm141, %vm125
    %vm158 = vmxor %vm142, %vm126
    %vm159 = vmxor %vm143, %vm127
    %vm160 = vmxor %vm144, %vm128
    %vm161 = vmxor %vm145, %vm129
    %vm162 = vmxor %vm146, %vm130
    %vm163 = vmxor %vm147, %vm131
    %vm164 = vmxor %vm148, %vm132
    %vm165 = vmxor %vm149, %vm133
    %vm166 = vmxor %vm150, 1
    %vm167 = vmxor %vm151, 1
    %vm168 = vmxor %vm152, 1
    %vm169 = vmxor %vm153, 1
    %vm170 = vmxor %vm154, 1
    %vm171 = vmxor %vm155, 1
    %vm172 = vmxor %vm156, 1
    %vm173 = vmxor %vm157, 1
    %vm174 = vmxor %vm158, 1
    %vm175 = vmxor %vm159, 1
    %vm176 = vmxor %vm160, 1
    %vm177 = vmxor %vm161, 1
    %vm178 = vmxor %vm162, 1
    %vm179 = vmxor %vm163, 1
    %vm180 = vmxor %vm164, 1
    %vm181 = vmxor %vm165, 1
    %v182 = vsel %vm166, %v43, 0.0
    %v183 = vsel %vm167, %v44, 0.0
    %v184 = vsel %vm168, %v45, 0.0
    %v185 = vsel %vm169, %v46, 0.0
    %v186 = vsel %vm170, %v47, 0.0
    %v187 = vsel %vm171, %v48, 0.0
    %v188 = vsel %vm172, %v49, 0.0
    %v189 = vsel %vm173, %v50, 0.0
    %v190 = vsel %vm174, %v51, 0.0
    %v191 = vsel %vm175, %v52, 0.0
    %v192 = vsel %vm176, %v53, 0.0
    %v193 = vsel %vm177, %v54, 0.0
    %v194 = vsel %vm178, %v55, 0.0
    %v195 = vsel %vm179, %v56, 0.0
    %v196 = vsel %vm180, %v57, 0.0
    %v197 = vsel %vm181, %v58, 0.0
    %v198 = vld [vmem:[#allocation7] sm:$0xff]
    %v199 = vld [vmem:[#allocation2] sm:$0xff]
    %200 = vmatprep.subr.mxu0 0.0
    %201 = vmatpush1.msra.mxu0 %v197
    %202 = vmatprep.subr.mxu0 0.0
    %203 = vmatpush1.msra.mxu0 %v196
    %204 = vmatprep.subr.mxu0 0.0
    %205 = vmatpush1.msra.mxu0 %v195
    %206 = vmatprep.subr.mxu0 0.0
    %207 = vmatpush1.msra.mxu0 %v194
    %208 = vmatprep.subr.mxu0 0.0
    %209 = vmatpush1.msra.mxu0 %v193
    %210 = vmatprep.subr.mxu0 0.0
    %211 = vmatpush1.msra.mxu0 %v192
    %212 = vmatprep.subr.mxu0 0.0
    %213 = vmatpush1.msra.mxu0 %v191
    %214 = vmatprep.subr.mxu0 0.0
    %215 = vmatpush1.msra.mxu0 %v190
    %216 = vmatprep.subr.mxu0 0.0
    %217 = vmatpush1.msra.mxu0 %v189
    %218 = vmatprep.subr.mxu0 0.0
    %219 = vmatpush1.msra.mxu0 %v188
    %220 = vmatprep.subr.mxu0 0.0
    %221 = vmatpush1.msra.mxu0 %v187
    %222 = vmatprep.subr.mxu0 0.0
    %223 = vmatpush1.msra.mxu0 %v186
    %224 = vmatprep.subr.mxu0 0.0
    %225 = vmatpush1.msra.mxu0 %v185
    %226 = vmatprep.subr.mxu0 0.0
    %227 = vmatpush1.msra.mxu0 %v184
    %228 = vmatprep.subr.mxu0 0.0
    %229 = vmatpush1.msra.mxu0 %v183
    %230 = vmatprep.subr.mxu0 0.0
    %231 = vmatpush1.msra.mxu0 %v182
    %232 = vmatprep.subr.mxu0 0.0
    %233 = vmatpush2.msra.mxu0 0.0
    %234 = vmatprep.subr.mxu0 0.0
    %235 = vmatpush2.msra.mxu0 0.0
    %236 = vmatprep.subr.mxu0 0.0
    %237 = vmatpush2.msra.mxu0 0.0
    %238 = vmatprep.subr.mxu0 0.0
    %239 = vmatpush2.msra.mxu0 0.0
    %240 = vmatprep.subr.mxu0 0.0
    %241 = vmatpush2.msra.mxu0 0.0
    %242 = vmatprep.subr.mxu0 0.0
    %243 = vmatpush2.msra.mxu0 0.0
    %244 = vmatprep.subr.mxu0 0.0
    %245 = vmatpush2.msra.mxu0 0.0
    %246 = vmatprep.subr.mxu0 0.0
    %247 = vmatpush2.msra.mxu0 0.0
    %248 = vmatprep.subr.mxu0 0.0
    %249 = vmatpush2.msra.mxu0 0.0
    %250 = vmatprep.subr.mxu0 0.0
    %251 = vmatpush2.msra.mxu0 0.0
    %252 = vmatprep.subr.mxu0 0.0
    %253 = vmatpush2.msra.mxu0 0.0
    %254 = vmatprep.subr.mxu0 0.0
    %255 = vmatpush2.msra.mxu0 0.0
    %256 = vmatprep.subr.mxu0 0.0
    %257 = vmatpush2.msra.mxu0 0.0
    %258 = vmatprep.subr.mxu0 0.0
    %259 = vmatpush2.msra.mxu0 0.0
    %260 = vmatprep.subr.mxu0 0.0
    %261 = vmatpush2.msra.mxu0 0.0
    %262 = vmatprep.subr.mxu0 0.0
    %263 = vmatpush2.msra.mxu0 0.0
    %264 = vmatprep.mubr.f32.mxu0 0.0
    %265 = vmatmul.mubr.f32.gmra.mxu0 %v199
    %v266 = vpop.f32.mrf.mxu0
    %v267 = vadd.f32 0.0, %v266
    %v268 = vpop.f32.mrf.mxu0
    %269 = vdwg.mxu0
    %v270 = vadd.f32 %v198, %v267
    %271 = vst [vmem:[#allocation7] sm:$0xff] %v270
    // Predicated region
    $region22: #{tpu_custom_call.1} parent=1 // pred_check
      _
    $region23: #{tpu_custom_call.1} parent=1 // pred_check_branch
      %273 = sbr.rel (0) target = $region25
    $region24: #{tpu_custom_call.1} parent=1 // pred_region
      %s275 = ssub.s32 128, 128
      %276 = vsyncadd [#allocation4], %s275
      %s278 = sshll.u32 [#allocation7], 4
      %s279 = int_to_ptr.vmem [resolvable:$true] %s278
      %281 = dma.vmem_to_hbm [thread:$0]  %s279, 128, %s2, [#allocation4]
    $region25: #{tpu_custom_call.1} parent=1 // pred_fallthru
      _
    // Predicated region
    $region26: #{tpu_custom_call.1} parent=1 // pred_check
      _
    $region27: #{tpu_custom_call.1} parent=1 // pred_check_branch
      %283 = sbr.rel (0) target = $region29
    $region28: #{tpu_custom_call.1} parent=1 // pred_region
      %284 = dma.done [#allocation4], 128
    $region29: #{tpu_custom_call.1} parent=1 // pred_fallthru
      _
    %285 = vsyncpa [#allocation3], 1
    %286 = vsyncpa [#allocation6], 1
    %287 = vsyncpa [#allocation4], 1

</llo_original>
